<compile_context>
chip_gen: v7x
topology: tpu7x:2x2x1
jax: 0.10.0
libtpu: 0.0.40
codegen_flags: <defaults>
</compile_context>

<pallas_src>
import functools

import jax
import jax.numpy as jnp
from jax.experimental import pallas as pl
from jax.experimental.pallas import tpu as pltpu

MIN_STD = 0.1
LEAKY_SLOPE = 1.0  # nn.LeakyReLU(True) -> negative_slope == True == 1.0 (identity)


def _repr_model_kernel(x_ref, w1_ref, b1_ref, w2_ref, b2_ref, out_ref, *,
                       latent_dim):
    x = x_ref[...]

    # Linear 1: weights pre-transposed to [C_in, C_out] -> direct MXU feed.
    h = jnp.dot(x, w1_ref[...], preferred_element_type=jnp.float32)
    h = h + b1_ref[...]                       # b1 is (1, C): broadcasts over batch

    # nn.LeakyReLU(True) == negative_slope 1.0 == identity -> op removed.

    # Fused Linear 2: single MXU dot against concatenated [C, 2*latent] weight.
    y = jnp.dot(h.astype(w2_ref.dtype), w2_ref[...],
                preferred_element_type=jnp.float32)
    y = y + b2_ref[...]

    # sigma = 2*sigmoid(log_sigma/2) + min_std, applied only to the log_sigma
    # lanes via an iota mask (no cross-lane split/concat; EUP work on the mu
    # half is free — the EUP slot is otherwise idle).
    sig = 2.0 * jax.nn.sigmoid(y * 0.5) + MIN_STD
    col = jax.lax.broadcasted_iota(jnp.int32, y.shape, dimension=1)
    out_ref[...] = jnp.where(col < latent_dim, y, sig).astype(out_ref.dtype)


def representation_model_forward(x, params, *, block_b=128, mxu_dtype=None):
    """x: [B, C]. params: dict with w1,b1,w2,b2 in PyTorch nn.Linear layout."""
    B, C = x.shape
    w1, b1, w2, b2 = params["w1"], params["b1"], params["w2"], params["b2"]
    latent_dim = w2.shape[0] // 2
    two_l = 2 * latent_dim

    # Wrapper-side glue (one-time, free): transpose weights to [K, N], 2-D biases.
    w1_t = jnp.asarray(w1).T                      # [C, C]
    w2_t = jnp.asarray(w2).T                      # [C, 2*latent]
    b1_2d = jnp.asarray(b1).reshape(1, C)
    b2_2d = jnp.asarray(b2).reshape(1, two_l)

    if mxu_dtype is not None:                     # optional bf16 MXU operands (v6e/v7x)
        x = x.astype(mxu_dtype)
        w1_t = w1_t.astype(mxu_dtype)
        w2_t = w2_t.astype(mxu_dtype)

    # Batch tiling: weights stay resident; x / out are pipelined per tile.
    tb = block_b if (B % block_b == 0) else B
    grid = (B // tb,)

    kernel = functools.partial(_repr_model_kernel, latent_dim=latent_dim)

    out = pl.pallas_call(
        kernel,
        out_shape=jax.ShapeDtypeStruct((B, two_l), jnp.float32),
        grid_spec=pltpu.PrefetchScalarGridSpec(
            num_scalar_prefetch=0,
            grid=grid,
            in_specs=[
                pl.BlockSpec((tb, C), lambda i: (i, 0)),        # x tile
                pl.BlockSpec((C, C), lambda i: (0, 0)),         # W1^T (resident)
                pl.BlockSpec((1, C), lambda i: (0, 0)),         # b1   (resident)
                pl.BlockSpec((C, two_l), lambda i: (0, 0)),     # W2^T (resident)
                pl.BlockSpec((1, two_l), lambda i: (0, 0)),     # b2   (resident)
            ],
            out_specs=pl.BlockSpec((tb, two_l), lambda i: (i, 0)),
        ),
        compiler_params=pltpu.CompilerParams(
            dimension_semantics=("parallel",),                  # shards across TCs (v7x)
        ),
    )(x, w1_t, b1_2d, w2_t, b2_2d)

    # Lane-dense single output; split into (mu, sigma) with plain XLA slices.
    mu = out[:, :latent_dim]
    sigma = out[:, latent_dim:]
    return mu, sigma


def init_params(key, in_channels, latent_dim):
    """Deterministic synthetic init matching nn.Linear parameter shapes."""
    k1, k2, k3, k4 = jax.random.split(key, 4)
    s1 = 1.0 / jnp.sqrt(in_channels)
    w1 = jax.random.uniform(k1, (in_channels, in_channels), jnp.float32, -s1, s1)
    b1 = jax.random.uniform(k2, (in_channels,), jnp.float32, -s1, s1)
    w2 = jax.random.uniform(k3, (2 * latent_dim, in_channels), jnp.float32, -s1, s1)
    b2 = jax.random.uniform(k4, (2 * latent_dim,), jnp.float32, -s1, s1)
    return {"w1": w1, "b1": b1, "w2": w2, "b2": b2}


def _reference_forward(x, params, latent_dim):
    """Pure-JAX reference mirroring the PyTorch module exactly."""
    h = x @ params["w1"].T + params["b1"]
    h = jnp.where(h >= 0, h, LEAKY_SLOPE * h)      # LeakyReLU(True) -> slope 1.0
    y = h @ params["w2"].T + params["b2"]
    mu, log_sigma = y[..., :latent_dim], y[..., latent_dim:]
    sigma = 2.0 * jax.nn.sigmoid(log_sigma / 2.0) + MIN_STD
    return mu, sigma


if __name__ == "__main__":
    B, IN_CHANNELS, LATENT_DIM = 8, 32, 16

    key = jax.random.PRNGKey(0)
    kx, kp = jax.random.split(key)
    x = jax.random.normal(kx, (B, IN_CHANNELS), jnp.float32)
    params = init_params(kp, IN_CHANNELS, LATENT_DIM)

    mu, sigma = representation_model_forward(x, params)
    jax.block_until_ready((mu, sigma))

    mu_ref, sigma_ref = _reference_forward(x, params, LATENT_DIM)
    assert mu.shape == (B, LATENT_DIM) and sigma.shape == (B, LATENT_DIM)
    assert jnp.allclose(mu, mu_ref, atol=1e-5, rtol=1e-5)
    assert jnp.allclose(sigma, sigma_ref, atol=1e-5, rtol=1e-5)

    print("KERNEL_OK")
</pallas_src>

<mosaic_0001>
module attributes {stable_mosaic.version = 11 : i64} {
  func.func @_repr_model_kernel(%arg0: i32, %arg1: memref<8x32xf32, #tpu.memory_space<vmem>>, %arg2: memref<32x32xf32, #tpu.memory_space<vmem>>, %arg3: memref<1x32xf32, #tpu.memory_space<vmem>>, %arg4: memref<32x32xf32, #tpu.memory_space<vmem>>, %arg5: memref<1x32xf32, #tpu.memory_space<vmem>>, %arg6: memref<8x32xf32, #tpu.memory_space<vmem>>) attributes {dimension_semantics = [#tpu.dimension_semantics<parallel>], iteration_bounds = array<i64: 1>, scalar_prefetch = 0 : i64, scratch_operands = 0 : i64, tpu.core_type = #tpu.core_type<tc>, window_params = [{transform_indices = @transform_0, window_bounds = array<i64: 8, 32>}, {pipeline_mode = #tpu.pipeline_mode<synchronous>, transform_indices = @transform_1, window_bounds = array<i64: 32, 32>}, {pipeline_mode = #tpu.pipeline_mode<synchronous>, transform_indices = @transform_2, window_bounds = array<i64: 1, 32>}, {pipeline_mode = #tpu.pipeline_mode<synchronous>, transform_indices = @transform_3, window_bounds = array<i64: 32, 32>}, {pipeline_mode = #tpu.pipeline_mode<synchronous>, transform_indices = @transform_4, window_bounds = array<i64: 1, 32>}, {transform_indices = @transform_5, window_bounds = array<i64: 8, 32>}]} {
    %c0 = arith.constant 0 : index
    %c0_0 = arith.constant 0 : index
    %0 = vector.load %arg1[%c0, %c0_0] : memref<8x32xf32, #tpu.memory_space<vmem>>, vector<8x32xf32>
    %c0_1 = arith.constant 0 : index
    %c0_2 = arith.constant 0 : index
    %1 = vector.load %arg2[%c0_1, %c0_2] : memref<32x32xf32, #tpu.memory_space<vmem>>, vector<32x32xf32>
    %cst = arith.constant dense<0.000000e+00> : vector<8x32xf32>
    %2 = tpu.matmul %0, %1, %cst {dimension_numbers = #tpu.dot_dimension_numbers<[1], [0], [0], [1], [0, 0, 1, 1], [], []>} : vector<8x32xf32>, vector<32x32xf32>, vector<8x32xf32> -> vector<8x32xf32>
    %c0_3 = arith.constant 0 : index
    %c0_4 = arith.constant 0 : index
    %3 = vector.load %arg3[%c0_3, %c0_4] : memref<1x32xf32, #tpu.memory_space<vmem>>, vector<1x32xf32>
    %4 = vector.broadcast %3 : vector<1x32xf32> to vector<8x32xf32>
    %5 = arith.addf %2, %4 : vector<8x32xf32>
    %c0_5 = arith.constant 0 : index
    %c0_6 = arith.constant 0 : index
    %6 = vector.load %arg4[%c0_5, %c0_6] : memref<32x32xf32, #tpu.memory_space<vmem>>, vector<32x32xf32>
    %cst_7 = arith.constant dense<0.000000e+00> : vector<8x32xf32>
    %7 = tpu.matmul %5, %6, %cst_7 {dimension_numbers = #tpu.dot_dimension_numbers<[1], [0], [0], [1], [0, 0, 1, 1], [], []>} : vector<8x32xf32>, vector<32x32xf32>, vector<8x32xf32> -> vector<8x32xf32>
    %c0_8 = arith.constant 0 : index
    %c0_9 = arith.constant 0 : index
    %8 = vector.load %arg5[%c0_8, %c0_9] : memref<1x32xf32, #tpu.memory_space<vmem>>, vector<1x32xf32>
    %9 = vector.broadcast %8 : vector<1x32xf32> to vector<8x32xf32>
    %10 = arith.addf %7, %9 : vector<8x32xf32>
    %cst_10 = arith.constant 5.000000e-01 : f32
    %11 = vector.broadcast %cst_10 : f32 to vector<8x32xf32>
    %12 = arith.mulf %10, %11 : vector<8x32xf32>
    %13 = arith.negf %12 : vector<8x32xf32>
    %14 = math.exp %13 : vector<8x32xf32>
    %cst_11 = arith.constant 1.000000e+00 : f32
    %15 = vector.broadcast %cst_11 : f32 to vector<8x32xf32>
    %16 = arith.addf %15, %14 : vector<8x32xf32>
    %17 = arith.divf %15, %16 : vector<8x32xf32>
    %cst_12 = arith.constant 2.000000e+00 : f32
    %18 = vector.broadcast %cst_12 : f32 to vector<8x32xf32>
    %19 = arith.mulf %18, %17 : vector<8x32xf32>
    %cst_13 = arith.constant 1.000000e-01 : f32
    %20 = vector.broadcast %cst_13 : f32 to vector<8x32xf32>
    %21 = arith.addf %19, %20 : vector<8x32xf32>
    %22 = tpu.iota {dimensions = array<i32: 1>} : vector<8x32xi32>
    %c16_i32 = arith.constant 16 : i32
    %23 = vector.broadcast %c16_i32 : i32 to vector<8x32xi32>
    %24 = arith.cmpi slt, %22, %23 : vector<8x32xi32>
    %25 = arith.select %24, %10, %21 : vector<8x32xi1>, vector<8x32xf32>
    %c0_14 = arith.constant 0 : index
    %c0_15 = arith.constant 0 : index
    %26 = vector.load %arg6[%c0_14, %c0_15] : memref<8x32xf32, #tpu.memory_space<vmem>>, vector<8x32xf32>
    tpu.vector_store %arg6[%c0_14, %c0_15], %25 {strides = array<i32>} : memref<8x32xf32, #tpu.memory_space<vmem>>, vector<8x32xf32>,
    return
  }
  func.func @transform_0(%arg0: i32) -> (i32, i32) {
    %c0_i32 = arith.constant 0 : i32
    %c0_i32_0 = arith.constant 0 : i32
    return %arg0, %c0_i32 : i32, i32
  }
  func.func @transform_1(%arg0: i32) -> (i32, i32) {
    %c0_i32 = arith.constant 0 : i32
    %c0_i32_0 = arith.constant 0 : i32
    %c0_i32_1 = arith.constant 0 : i32
    return %c0_i32, %c0_i32_0 : i32, i32
  }
  func.func @transform_2(%arg0: i32) -> (i32, i32) {
    %c0_i32 = arith.constant 0 : i32
    %c0_i32_0 = arith.constant 0 : i32
    %c0_i32_1 = arith.constant 0 : i32
    return %c0_i32, %c0_i32_0 : i32, i32
  }
  func.func @transform_3(%arg0: i32) -> (i32, i32) {
    %c0_i32 = arith.constant 0 : i32
    %c0_i32_0 = arith.constant 0 : i32
    %c0_i32_1 = arith.constant 0 : i32
    return %c0_i32, %c0_i32_0 : i32, i32
  }
  func.func @transform_4(%arg0: i32) -> (i32, i32) {
    %c0_i32 = arith.constant 0 : i32
    %c0_i32_0 = arith.constant 0 : i32
    %c0_i32_1 = arith.constant 0 : i32
    return %c0_i32, %c0_i32_0 : i32, i32
  }
  func.func @transform_5(%arg0: i32) -> (i32, i32) {
    %c0_i32 = arith.constant 0 : i32
    %c0_i32_0 = arith.constant 0 : i32
    return %arg0, %c0_i32 : i32, i32
  }
}

</mosaic_0001>

<llo_original>
// kernel: tpu_custom_call.1
$region0: #{tpu_custom_call.1}
  #allocation0 [shape = 'u32[]', space=smem, size = 0x4, offset = 0x4, fixed_abs, tag = 'smem constant byte address 0x4 - core index']
  #allocation1 [shape = 'u32[144,128]{1,0:T(1,128)}', space=vmem, size = 0x12000, scoped, tag = 'internal scratch']
  %s0 = inlined_call_operand.hbm [shape: f32[8,32], index: 0, kind: input, shape index: {}]
  %s1 = inlined_call_operand.hbm [shape: f32[32,32], index: 1, kind: input, shape index: {}]
  %s2 = inlined_call_operand.vmem [shape: f32[1,32], index: 2, kind: input, shape index: {}]
  %s3 = inlined_call_operand.hbm [shape: f32[32,32], index: 3, kind: input, shape index: {}]
  %s4 = inlined_call_operand.vmem [shape: f32[1,32], index: 4, kind: input, shape index: {}]
  %s5 = inlined_call_operand.hbm [shape: f32[8,32], index: 5, kind: output, shape index: {}]
  %s6 = sld [smem:[#allocation0]]
  $region42: #{tpu_custom_call.1} parent=0
    _
  %s8 = ssub.s32 1, %s6
  %s9 = scalar_select 0, %s8, %s6
  $region1: #{tpu_custom_call.1} parent=0
    #allocation2 [shape = 'u8[4096]{0}', space=vmem, size = 0x1000, scoped, tag = 'input window, operand 0, single buffered']
    #allocation3 [shape = 's32[1]{0}', space=sflag, size = 0x4, scoped, tag = 'scoped memory for tpu_custom_call.1']
    #allocation4 [shape = 's32[1]{0}', space=sflag, size = 0x4, scoped, tag = 'scoped memory for tpu_custom_call.1']
    #allocation5 [shape = 'u8[16384]{0}', space=vmem, size = 0x4000, scoped, tag = 'input window, operand 1, single buffered']
    #allocation6 [shape = 's32[1]{0}', space=sflag, size = 0x4, scoped, tag = 'scoped memory for tpu_custom_call.1']
    #allocation7 [shape = 'u8[16384]{0}', space=vmem, size = 0x4000, scoped, tag = 'input window, operand 3, single buffered']
    #allocation8 [shape = 'u8[4096]{0}', space=vmem, size = 0x1000, scoped, tag = 'output window, operand 0, single buffered']
    %10 = vsyncpa [#allocation3], 0
    %11 = vsyncpa [#allocation6], 0
    %12 = vsyncpa [#allocation4], 0
    // Predicated region
    $region2: #{tpu_custom_call.1} parent=1 // pred_check
      _
    $region3: #{tpu_custom_call.1} parent=1 // pred_check_branch
      %14 = sbr.rel (0) target = $region5
    $region4: #{tpu_custom_call.1} parent=1 // pred_region
      %s16 = ssub.s32 128, 128
      %17 = vsyncadd [#allocation3], %s16
      %s19 = sshll.u32 [#allocation2], 4
      %s20 = int_to_ptr.vmem [resolvable:$true] %s19
      %22 = dma.hbm_to_vmem [thread:$0]  %s0, 128, %s20, [#allocation3]
    $region5: #{tpu_custom_call.1} parent=1 // pred_fallthru
      _
    // Predicated region
    $region6: #{tpu_custom_call.1} parent=1 // pred_check
      _
    $region7: #{tpu_custom_call.1} parent=1 // pred_check_branch
      %24 = sbr.rel (0) target = $region9
    $region8: #{tpu_custom_call.1} parent=1 // pred_region
      %s26 = ssub.s32 512, 512
      %27 = vsyncadd [#allocation6], %s26
      %s28 = sshll.u32 [#allocation5], 4
      %s29 = int_to_ptr.vmem [resolvable:$true] %s28
      %34 = dma.hbm_to_vmem [thread:$0]  %s1, 512, %s29, [#allocation6], 128, 128, 8
    $region9: #{tpu_custom_call.1} parent=1 // pred_fallthru
      _
    // Predicated region
    $region10: #{tpu_custom_call.1} parent=1 // pred_check
      _
    $region11: #{tpu_custom_call.1} parent=1 // pred_check_branch
      %36 = sbr.rel (0) target = $region13
    $region12: #{tpu_custom_call.1} parent=1 // pred_region
      _
    $region13: #{tpu_custom_call.1} parent=1 // pred_fallthru
      _
    // Predicated region
    $region14: #{tpu_custom_call.1} parent=1 // pred_check
      _
    $region15: #{tpu_custom_call.1} parent=1 // pred_check_branch
      %38 = sbr.rel (0) target = $region17
    $region16: #{tpu_custom_call.1} parent=1 // pred_region
      %s40 = ssub.s32 512, 512
      %41 = vsyncadd [#allocation6], %s40
      %s42 = sshll.u32 [#allocation7], 4
      %s43 = int_to_ptr.vmem [resolvable:$true] %s42
      %48 = dma.hbm_to_vmem [thread:$0]  %s3, 512, %s43, [#allocation6], 128, 128, 8
    $region17: #{tpu_custom_call.1} parent=1 // pred_fallthru
      _
    // Predicated region
    $region18: #{tpu_custom_call.1} parent=1 // pred_check
      _
    $region19: #{tpu_custom_call.1} parent=1 // pred_check_branch
      %50 = sbr.rel (0) target = $region21
    $region20: #{tpu_custom_call.1} parent=1 // pred_region
      _
    $region21: #{tpu_custom_call.1} parent=1 // pred_fallthru
      _
    // Predicated region
    $region22: #{tpu_custom_call.1} parent=1 // pred_check
      _
    $region23: #{tpu_custom_call.1} parent=1 // pred_check_branch
      %52 = sbr.rel (0) target = $region25
    $region24: #{tpu_custom_call.1} parent=1 // pred_region
      %53 = dma.done [#allocation3], 128
    $region25: #{tpu_custom_call.1} parent=1 // pred_fallthru
      _
    // Predicated region
    $region26: #{tpu_custom_call.1} parent=1 // pred_check
      _
    $region27: #{tpu_custom_call.1} parent=1 // pred_check_branch
      %55 = sbr.rel (0) target = $region29
    $region28: #{tpu_custom_call.1} parent=1 // pred_region
      %56 = dma.done [#allocation6], 512
    $region29: #{tpu_custom_call.1} parent=1 // pred_fallthru
      _
    // Predicated region
    $region30: #{tpu_custom_call.1} parent=1 // pred_check
      _
    $region31: #{tpu_custom_call.1} parent=1 // pred_check_branch
      %58 = sbr.rel (0) target = $region33
    $region32: #{tpu_custom_call.1} parent=1 // pred_region
      %59 = dma.done [#allocation6], 512
    $region33: #{tpu_custom_call.1} parent=1 // pred_fallthru
      _
    %v60 = vld [vmem:[#allocation2] sm:$0xff]
    %v61 = vld [vmem:[#allocation5] sm:$0xff]
    %v62 = vld [vmem:[#allocation5 + $0x8] sm:$0xff]
    %v63 = vld [vmem:[#allocation5 + $0x10] sm:$0xff]
    %v64 = vld [vmem:[#allocation5 + $0x18] sm:$0xff]
    %v65 = vld [vmem:[%s2] sm:$0x1]
    %v67 = vlaneseq
    %v68 = vshrl.u32 %v67, 7
    %v69 = vsub.s32 0, %v68
    %v70 = vrot.slane %v65, %v69
    %vm72 = vcmask 261120
    %v74 = vsel %vm72, %v60, 0
    %76 = vmatprep.subr.mxu0 0.0
    %77 = vmatpush1.msra.mxu0 %v61
    %78 = vmatprep.subr.mxu0 0.0
    %79 = vmatpush1.msra.mxu0 %v62
    %80 = vmatprep.subr.mxu0 0.0
    %81 = vmatpush1.msra.mxu0 %v63
    %82 = vmatprep.subr.mxu0 0.0
    %83 = vmatpush1.msra.mxu0 %v64
    %84 = vmatprep.subr.mxu0 0.0
    %85 = vmatpush1.msra.mxu0 0.0
    %86 = vmatprep.subr.mxu0 0.0
    %87 = vmatpush1.msra.mxu0 0.0
    %88 = vmatprep.subr.mxu0 0.0
    %89 = vmatpush1.msra.mxu0 0.0
    %90 = vmatprep.subr.mxu0 0.0
    %91 = vmatpush1.msra.mxu0 0.0
    %92 = vmatprep.subr.mxu0 0.0
    %93 = vmatpush1.msra.mxu0 0.0
    %94 = vmatprep.subr.mxu0 0.0
    %95 = vmatpush1.msra.mxu0 0.0
    %96 = vmatprep.subr.mxu0 0.0
    %97 = vmatpush1.msra.mxu0 0.0
    %98 = vmatprep.subr.mxu0 0.0
    %99 = vmatpush1.msra.mxu0 0.0
    %100 = vmatprep.subr.mxu0 0.0
    %101 = vmatpush1.msra.mxu0 0.0
    %102 = vmatprep.subr.mxu0 0.0
    %103 = vmatpush1.msra.mxu0 0.0
    %104 = vmatprep.subr.mxu0 0.0
    %105 = vmatpush1.msra.mxu0 0.0
    %106 = vmatprep.subr.mxu0 0.0
    %107 = vmatpush1.msra.mxu0 0.0
    %108 = vmatprep.subr.mxu0 0.0
    %109 = vmatpush1.msra.mxu0 0.0
    %110 = vmatprep.subr.mxu0 0.0
    %111 = vmatpush1.msra.mxu0 0.0
    %112 = vmatprep.subr.mxu0 0.0
    %113 = vmatpush1.msra.mxu0 0.0
    %114 = vmatprep.subr.mxu0 0.0
    %115 = vmatpush1.msra.mxu0 0.0
    %116 = vmatprep.subr.mxu0 0.0
    %117 = vmatpush1.msra.mxu0 0.0
    %118 = vmatprep.subr.mxu0 0.0
    %119 = vmatpush1.msra.mxu0 0.0
    %120 = vmatprep.subr.mxu0 0.0
    %121 = vmatpush1.msra.mxu0 0.0
    %122 = vmatprep.subr.mxu0 0.0
    %123 = vmatpush1.msra.mxu0 0.0
    %124 = vmatprep.subr.mxu0 0.0
    %125 = vmatpush1.msra.mxu0 0.0
    %126 = vmatprep.subr.mxu0 0.0
    %127 = vmatpush1.msra.mxu0 0.0
    %128 = vmatprep.subr.mxu0 0.0
    %129 = vmatpush1.msra.mxu0 0.0
    %130 = vmatprep.subr.mxu0 0.0
    %131 = vmatpush1.msra.mxu0 0.0
    %132 = vmatprep.subr.mxu0 0.0
    %133 = vmatpush1.msra.mxu0 0.0
    %134 = vmatprep.subr.mxu0 0.0
    %135 = vmatpush1.msra.mxu0 0.0
    %136 = vmatprep.subr.mxu0 0.0
    %137 = vmatpush1.msra.mxu0 0.0
    %138 = vmatprep.subr.mxu0 0.0
    %139 = vmatpush1.msra.mxu0 0.0
    %140 = vmatprep.mubr.f32.mxu0 0.0
    %141 = vmatmul.mubr.f32.gmra.mrb[0].mxu0 %v74
    %v142 = vpop.f32.mrb[0].mxu0
    %v143 = vadd.f32 %v70, %v142
    %v144 = vpop.f32.mrb[0].mxu0
    %145 = vdwg.mxu0
    %v146 = vld [vmem:[#allocation7] sm:$0xff]
    %v147 = vld [vmem:[#allocation7 + $0x8] sm:$0xff]
    %v148 = vld [vmem:[#allocation7 + $0x10] sm:$0xff]
    %v149 = vld [vmem:[#allocation7 + $0x18] sm:$0xff]
    %v150 = vld [vmem:[%s4] sm:$0x1]
    %v152 = vlaneseq
    %v153 = vshrl.u32 %v152, 7
    %v154 = vsub.s32 0, %v153
    %v155 = vrot.slane %v150, %v154
    %v158 = vsel %vm72, %v143, 0
    %160 = vmatprep.subr.mxu0 0.0
    %161 = vmatpush1.msra.mxu0 %v146
    %162 = vmatprep.subr.mxu0 0.0
    %163 = vmatpush1.msra.mxu0 %v147
    %164 = vmatprep.subr.mxu0 0.0
    %165 = vmatpush1.msra.mxu0 %v148
    %166 = vmatprep.subr.mxu0 0.0
    %167 = vmatpush1.msra.mxu0 %v149
    %168 = vmatprep.subr.mxu0 0.0
    %169 = vmatpush1.msra.mxu0 0.0
    %170 = vmatprep.subr.mxu0 0.0
    %171 = vmatpush1.msra.mxu0 0.0
    %172 = vmatprep.subr.mxu0 0.0
    %173 = vmatpush1.msra.mxu0 0.0
    %174 = vmatprep.subr.mxu0 0.0
    %175 = vmatpush1.msra.mxu0 0.0
    %176 = vmatprep.subr.mxu0 0.0
    %177 = vmatpush1.msra.mxu0 0.0
    %178 = vmatprep.subr.mxu0 0.0
    %179 = vmatpush1.msra.mxu0 0.0
    %180 = vmatprep.subr.mxu0 0.0
    %181 = vmatpush1.msra.mxu0 0.0
    %182 = vmatprep.subr.mxu0 0.0
    %183 = vmatpush1.msra.mxu0 0.0
    %184 = vmatprep.subr.mxu0 0.0
    %185 = vmatpush1.msra.mxu0 0.0
    %186 = vmatprep.subr.mxu0 0.0
    %187 = vmatpush1.msra.mxu0 0.0
    %188 = vmatprep.subr.mxu0 0.0
    %189 = vmatpush1.msra.mxu0 0.0
    %190 = vmatprep.subr.mxu0 0.0
    %191 = vmatpush1.msra.mxu0 0.0
    %192 = vmatprep.subr.mxu0 0.0
    %193 = vmatpush1.msra.mxu0 0.0
    %194 = vmatprep.subr.mxu0 0.0
    %195 = vmatpush1.msra.mxu0 0.0
    %196 = vmatprep.subr.mxu0 0.0
    %197 = vmatpush1.msra.mxu0 0.0
    %198 = vmatprep.subr.mxu0 0.0
    %199 = vmatpush1.msra.mxu0 0.0
    %200 = vmatprep.subr.mxu0 0.0
    %201 = vmatpush1.msra.mxu0 0.0
    %202 = vmatprep.subr.mxu0 0.0
    %203 = vmatpush1.msra.mxu0 0.0
    %204 = vmatprep.subr.mxu0 0.0
    %205 = vmatpush1.msra.mxu0 0.0
    %206 = vmatprep.subr.mxu0 0.0
    %207 = vmatpush1.msra.mxu0 0.0
    %208 = vmatprep.subr.mxu0 0.0
    %209 = vmatpush1.msra.mxu0 0.0
    %210 = vmatprep.subr.mxu0 0.0
    %211 = vmatpush1.msra.mxu0 0.0
    %212 = vmatprep.subr.mxu0 0.0
    %213 = vmatpush1.msra.mxu0 0.0
    %214 = vmatprep.subr.mxu0 0.0
    %215 = vmatpush1.msra.mxu0 0.0
    %216 = vmatprep.subr.mxu0 0.0
    %217 = vmatpush1.msra.mxu0 0.0
    %218 = vmatprep.subr.mxu0 0.0
    %219 = vmatpush1.msra.mxu0 0.0
    %220 = vmatprep.subr.mxu0 0.0
    %221 = vmatpush1.msra.mxu0 0.0
    %222 = vmatprep.subr.mxu0 0.0
    %223 = vmatpush1.msra.mxu0 0.0
    %224 = vmatprep.mubr.f32.mxu0 0.0
    %225 = vmatmul.mubr.f32.gmra.mrb[0].mxu0 %v158
    %v226 = vpop.f32.mrb[0].mxu0
    %v227 = vadd.f32 %v155, %v226
    %v228 = vpop.f32.mrb[0].mxu0
    %229 = vdwg.mxu0
    %v230 = vmul.f32 %v227, 0.5
    %v231 = vxor.u32 %v230, 2147483648
    %v232 = vmul.f32 %v231, 1.442695
    %v233 = vpow.pop %v232
    %v234 = vadd.f32 %v233, 1.0
    %v235 = vrcp.pop %v234
    %v236 = vmul.f32 1.0, %v235
    %v237 = vmul.f32 %v236, 2.0
    %v238 = vadd.f32 %v237, 0.1
    %v239 = vlaneseq
    %v240 = vand.u32 %v239, 127
    %vm241 = vcmp.lt.s32.totalorder %v240, 16
    %v242 = vsel %vm241, %v227, %v238
    %243 = vst.msk [vmem:[#allocation8] sm:$0xff] %vm72, %v242
    // Predicated region
    $region34: #{tpu_custom_call.1} parent=1 // pred_check
      _
    $region35: #{tpu_custom_call.1} parent=1 // pred_check_branch
      %245 = sbr.rel (0) target = $region37
    $region36: #{tpu_custom_call.1} parent=1 // pred_region
      %s247 = ssub.s32 128, 128
      %248 = vsyncadd [#allocation4], %s247
      %s250 = sshll.u32 [#allocation8], 4
      %s251 = int_to_ptr.vmem [resolvable:$true] %s250
      %253 = dma.vmem_to_hbm [thread:$0]  %s251, 128, %s5, [#allocation4]
    $region37: #{tpu_custom_call.1} parent=1 // pred_fallthru
      _
    // Predicated region
    $region38: #{tpu_custom_call.1} parent=1 // pred_check
      _
    $region39: #{tpu_custom_call.1} parent=1 // pred_check_branch
      %255 = sbr.rel (0) target = $region41
    $region40: #{tpu_custom_call.1} parent=1 // pred_region
      %256 = dma.done [#allocation4], 128
    $region41: #{tpu_custom_call.1} parent=1 // pred_fallthru
      _
    %257 = vsyncpa [#allocation3], 1
    %258 = vsyncpa [#allocation6], 1
    %259 = vsyncpa [#allocation4], 1

</llo_original>
